<compile_context>
chip_gen: v5e
topology: v5e:2x2
jax: 0.10.0
libtpu: 0.0.40
codegen_flags: <defaults>
</compile_context>

<pallas_src>
import math

import jax
import jax.numpy as jnp
from jax import lax
from jax.experimental import pallas as pl
from jax.experimental.pallas import tpu as pltpu

LN_EPS = 1e-5  # PyTorch nn.LayerNorm default


def _prenorm_linear_kernel(x_ref, gamma_ref, beta_ref, w_ref, fb_ref, o_ref, y_ref):
    # x_ref: (TILE_M, D)   gamma/beta: (1, D)   w_ref: (D, TILE_N)
    # fb_ref: (1, TILE_N)  o_ref: (TILE_M, TILE_N)  y_ref: VMEM scratch (TILE_M, D)
    #
    # LayerNorm once per row tile (inner grid axis j == 0); cache the normalized
    # activations (already in the matmul compute dtype) in VMEM scratch and reuse
    # them for every output-column tile j.
    @pl.when(pl.program_id(1) == 0)
    def _():
        x = x_ref[...].astype(jnp.float32)            # LN reduction math in f32
        mean = jnp.mean(x, axis=-1, keepdims=True)
        xc = x - mean
        var = jnp.mean(xc * xc, axis=-1, keepdims=True)
        inv = lax.rsqrt(var + LN_EPS)
        y = xc * inv * gamma_ref[...].astype(jnp.float32) \
            + beta_ref[...].astype(jnp.float32)
        y_ref[...] = y.astype(y_ref.dtype)

    out = jnp.dot(y_ref[...], w_ref[...], preferred_element_type=jnp.float32)
    out = out + fb_ref[...].astype(jnp.float32)
    o_ref[...] = out.astype(o_ref.dtype)


def _round_up(x, m):
    return (x + m - 1) // m * m


def _tpu_vmem_and_gen():
    """Best-effort (vmem_capacity_bytes, generation) query with safe fallbacks."""
    vmem = None
    gen = None
    try:
        info = pltpu.get_tpu_info()
        vmem = int(getattr(info, "vmem_capacity_bytes"))
    except Exception:
        vmem = None
    try:
        kind = jax.devices()[0].device_kind.lower()
        for g in (7, 6, 5, 4):
            if "v%d" % g in kind:
                gen = g
                break
    except Exception:
        gen = None
    if vmem is None or vmem <= 0:
        # v7x has 64 MiB/TC; assume the smaller budget when we can't tell.
        vmem = (128 << 20) if gen in (4, 5, 6) else (64 << 20)
    return vmem, gen


def prenorm_linear(x, gamma, beta, w, fb, *, tile_m=None, tile_n=None,
                   compute_dtype=None):
    """PreNorm with fn = Linear:  out = LayerNorm(x) @ W + b.

    x: (..., D), gamma/beta: (D,), w: (D, D_out), fb: (D_out,).
    compute_dtype: dtype of the normalized activations / weight fed to the MXU
    (default: w.dtype).  Note: if x is f32 but w is bf16, the LN output is cast
    to bf16 before the matmul (native MXU path); pass compute_dtype=jnp.float32
    to keep full precision in mixed-dtype cases.
    """
    *lead, D = x.shape
    D_out = w.shape[1]
    rows = math.prod(lead) if lead else 1
    x2 = x.reshape(rows, D)

    compute_dtype = jnp.dtype(w.dtype) if compute_dtype is None else jnp.dtype(compute_dtype)
    w_p = w if jnp.dtype(w.dtype) == compute_dtype else w.astype(compute_dtype)

    x_isz = jnp.dtype(x.dtype).itemsize
    c_isz = compute_dtype.itemsize
    w_isz = jnp.dtype(w_p.dtype).itemsize
    o_isz = x_isz
    fb_isz = jnp.dtype(fb.dtype).itemsize

    vmem_cap, gen = _tpu_vmem_and_gen()
    budget = max(16 << 20, int(0.72 * vmem_cap))

    # --- tile_m: generation-aware default (cover the W-slab DMA with MXU work) ---
    mult = {4: 8, 2: 16, 1: 32}
    row_mult = max(mult.get(x_isz, 8), mult.get(c_isz, 8))
    if tile_m is None:
        is_half = c_isz <= 2
        if gen == 5:
            tile_m = 256
        elif gen == 7:
            tile_m = 512 if is_half else 384
        else:  # v6e / unknown
            tile_m = 768 if is_half else 384
    tile_m = max(row_mult, min(tile_m, _round_up(rows, row_mult)))
    tile_m = _round_up(tile_m, row_mult)

    # --- tile_n: lane-dense (multiple of 128); collapse N axis when W fits VMEM ---
    n_full = _round_up(D_out, 128)

    def footprint(tm, tn, w_bufs):
        return (2 * tm * D * x_isz          # x tile (double-buffered)
                + tm * D * c_isz            # normalized-activation scratch
                + w_bufs * D * tn * w_isz   # W column slab(s)
                + 2 * tm * tn * o_isz       # output tile (double-buffered)
                + 2 * tn * fb_isz           # bias slab
                + 4 * D * 4)                # gamma/beta

    if tile_n is None:
        if footprint(tile_m, n_full, 2) <= budget:
            tile_n = n_full                 # weight-resident: W DMA'd exactly once
        else:
            tile_n = 512
    tile_n = max(128, min(tile_n, n_full))
    tile_n = _round_up(tile_n, 128)

    # Deeper W pipeline on v5e when W is actually N-streamed.
    w_bufs = 3 if (gen == 5 and tile_n < n_full
                   and footprint(tile_m, tile_n, 3) <= budget) else 2

    # --- adaptive shrink so the pipeline always fits the per-generation budget ---
    while footprint(tile_m, tile_n, w_bufs) > budget:
        if w_bufs > 2:
            w_bufs = 2
        elif tile_n > 128:
            tile_n = max(128, _round_up(tile_n // 2, 128))
        elif tile_m > row_mult:
            tile_m = max(row_mult, _round_up(tile_m // 2, row_mult))
        else:
            break  # smallest legal config; rely on vmem_limit_bytes headroom

    rows_p = _round_up(rows, tile_m)
    n_p = _round_up(D_out, tile_n)

    if rows_p != rows:                                   # tail rows -> pad, slice later
        x2 = jnp.pad(x2, ((0, rows_p - rows), (0, 0)))
    fb_p = fb.reshape(1, D_out)
    if n_p != D_out:                                     # pad output columns to lane width
        w_p = jnp.pad(w_p, ((0, 0), (0, n_p - D_out)))
        fb_p = jnp.pad(fb_p, ((0, 0), (0, n_p - D_out)))

    gamma2 = gamma.reshape(1, D)
    beta2 = beta.reshape(1, D)

    grid_i = rows_p // tile_m
    grid_j = n_p // tile_n
    grid = (grid_i, grid_j)

    vmem_limit = int(min(vmem_cap - (4 << 20),
                         max(budget, footprint(tile_m, tile_n, w_bufs) + (2 << 20))))

    # W BlockSpec: resident (constant index) when grid_j == 1, otherwise streamed
    # column slabs; on v5e use a 3-deep pipeline to hide the exposed W DMA.
    if w_bufs > 2 and grid_j > 1:
        w_spec = pl.BlockSpec((D, tile_n), lambda i, j: (0, j),
                              pipeline_mode=pl.Buffered(w_bufs))
    else:
        w_spec = pl.BlockSpec((D, tile_n), lambda i, j: (0, j))

    # W is re-fetched once per row tile only when it is N-streamed.
    w_streams = grid_i if grid_j > 1 else 1
    cost = pl.CostEstimate(
        flops=2 * rows_p * D * n_p,
        transcendentals=rows_p,
        bytes_accessed=(rows_p * D * x_isz
                        + D * n_p * w_isz * w_streams
                        + rows_p * n_p * o_isz
                        + n_p * fb_isz + 2 * D * 4),
    )

    out2 = pl.pallas_call(
        _prenorm_linear_kernel,
        out_shape=jax.ShapeDtypeStruct((rows_p, n_p), x.dtype),
        grid_spec=pltpu.PrefetchScalarGridSpec(
            num_scalar_prefetch=0,
            grid=grid,
            in_specs=[
                pl.BlockSpec((tile_m, D), lambda i, j: (i, 0)),   # x rows (resident over j)
                pl.BlockSpec((1, D), lambda i, j: (0, 0)),        # gamma
                pl.BlockSpec((1, D), lambda i, j: (0, 0)),        # beta
                w_spec,                                           # W column slab / resident
                pl.BlockSpec((1, tile_n), lambda i, j: (0, j)),   # bias column slab
            ],
            out_specs=pl.BlockSpec((tile_m, tile_n), lambda i, j: (i, j)),
            scratch_shapes=[pltpu.VMEM((tile_m, D), compute_dtype)],  # normalized acts
        ),
        compiler_params=pltpu.CompilerParams(
            # Row axis shards across TensorCores; N axis carries the y scratch.
            dimension_semantics=("parallel", "arbitrary"),
            vmem_limit_bytes=vmem_limit,
        ),
        cost_estimate=cost,
    )(x2, gamma2, beta2, w_p, fb_p)

    return out2[:rows, :D_out].reshape(*lead, D_out)


def prenorm_ref(x, gamma, beta, w, fb):
    xf = x.astype(jnp.float32)
    mean = jnp.mean(xf, axis=-1, keepdims=True)
    var = jnp.mean((xf - mean) ** 2, axis=-1, keepdims=True)
    y = (xf - mean) * lax.rsqrt(var + LN_EPS) * gamma.astype(jnp.float32) \
        + beta.astype(jnp.float32)
    out = y @ w.astype(jnp.float32) + fb.astype(jnp.float32)
    return out.astype(x.dtype)


if __name__ == "__main__":
    key = jax.random.PRNGKey(0)
    B, S, D = 2, 8, 32      # batch, seq, hidden (LayerNorm dim)
    D_out = D               # fn = Linear(dim, dim)
    # TODO(synk): `fn` in PreNorm is an arbitrary user module; a Linear is fused here
    # as the representative fn (attention/FFN variants would be separate kernels).

    kx, kw, kb = jax.random.split(key, 3)
    x = jax.random.normal(kx, (B, S, D), dtype=jnp.float32)

    # LayerNorm params: PyTorch default init (ones / zeros).
    gamma = jnp.ones((D,), jnp.float32)
    beta = jnp.zeros((D,), jnp.float32)

    # fn (Linear) params: deterministic synthetic init.
    w = jax.random.normal(kw, (D, D_out), dtype=jnp.float32) * 0.05
    fb = jax.random.normal(kb, (D_out,), dtype=jnp.float32) * 0.01

    # f32 path (matches the reference up to accumulation order).
    out = jax.block_until_ready(prenorm_linear(x, gamma, beta, w, fb))
    ref = prenorm_ref(x, gamma, beta, w, fb)
    assert out.shape == (B, S, D_out)
    assert jnp.allclose(out, ref, atol=1e-4, rtol=1e-4), "f32 mismatch vs reference"

    # bf16 weights/activations: exercises the native bf16 x bf16 -> f32 MXU path.
    x_bf = x.astype(jnp.bfloat16)
    w_bf = w.astype(jnp.bfloat16)
    fb_bf = fb.astype(jnp.bfloat16)
    out_bf = jax.block_until_ready(prenorm_linear(x_bf, gamma, beta, w_bf, fb_bf))
    assert out_bf.shape == (B, S, D_out)
    assert jnp.allclose(out_bf.astype(jnp.float32), ref, atol=1e-1, rtol=1e-1), \
        "bf16 mismatch vs reference"

    print("KERNEL_OK")
</pallas_src>

<mosaic_0001>
module attributes {stable_mosaic.version = 11 : i64} {
  func.func @_prenorm_linear_kernel(%arg0: i32, %arg1: i32, %arg2: memref<16x32xf32, #tpu.memory_space<vmem>>, %arg3: memref<1x32xf32, #tpu.memory_space<vmem>>, %arg4: memref<1x32xf32, #tpu.memory_space<vmem>>, %arg5: memref<32x128xf32, #tpu.memory_space<vmem>>, %arg6: memref<1x128xf32, #tpu.memory_space<vmem>>, %arg7: memref<16x128xf32, #tpu.memory_space<vmem>>, %arg8: memref<16x32xf32, #tpu.memory_space<vmem>>) attributes {dimension_semantics = [#tpu.dimension_semantics<parallel>, #tpu.dimension_semantics<arbitrary>], iteration_bounds = array<i64: 1, 1>, scalar_prefetch = 0 : i64, scratch_operands = 1 : i64, tpu.core_type = #tpu.core_type<tc>, window_params = [{transform_indices = @transform_0, window_bounds = array<i64: 16, 32>}, {pipeline_mode = #tpu.pipeline_mode<synchronous>, transform_indices = @transform_1, window_bounds = array<i64: 1, 32>}, {pipeline_mode = #tpu.pipeline_mode<synchronous>, transform_indices = @transform_2, window_bounds = array<i64: 1, 32>}, {transform_indices = @transform_3, window_bounds = array<i64: 32, 128>}, {transform_indices = @transform_4, window_bounds = array<i64: 1, 128>}, {transform_indices = @transform_5, window_bounds = array<i64: 16, 128>}]} {
    %c0_i32 = arith.constant 0 : i32
    %0 = arith.cmpi eq, %arg1, %c0_i32 : i32
    %1 = arith.extui %0 : i1 to i32
    %c0_i32_0 = arith.constant 0 : i32
    %2 = arith.cmpi ne, %1, %c0_i32_0 : i32
    scf.if %2 {
      %c0_8 = arith.constant 0 : index
      %c0_9 = arith.constant 0 : index
      %10 = vector.load %arg2[%c0_8, %c0_9] : memref<16x32xf32, #tpu.memory_space<vmem>>, vector<16x32xf32>
      %cst_10 = arith.constant dense<0.000000e+00> : vector<16xf32>
      %11 = vector.multi_reduction <add>, %10, %cst_10 [1] : vector<16x32xf32> to vector<16xf32>
      %12 = vector.shape_cast %11 : vector<16xf32> to vector<16x1xf32>
      %cst_11 = arith.constant 3.200000e+01 : f32
      %13 = vector.broadcast %cst_11 : f32 to vector<16x1xf32>
      %14 = arith.divf %12, %13 : vector<16x1xf32>
      %15 = vector.broadcast %14 : vector<16x1xf32> to vector<16x32xf32>
      %16 = arith.subf %10, %15 : vector<16x32xf32>
      %17 = arith.mulf %16, %16 : vector<16x32xf32>
      %cst_12 = arith.constant dense<0.000000e+00> : vector<16xf32>
      %18 = vector.multi_reduction <add>, %17, %cst_12 [1] : vector<16x32xf32> to vector<16xf32>
      %19 = vector.shape_cast %18 : vector<16xf32> to vector<16x1xf32>
      %cst_13 = arith.constant 3.200000e+01 : f32
      %20 = vector.broadcast %cst_13 : f32 to vector<16x1xf32>
      %21 = arith.divf %19, %20 : vector<16x1xf32>
      %cst_14 = arith.constant 9.99999974E-6 : f32
      %22 = vector.broadcast %cst_14 : f32 to vector<16x1xf32>
      %23 = arith.addf %21, %22 : vector<16x1xf32>
      %24 = math.rsqrt %23 : vector<16x1xf32>
      %25 = vector.broadcast %24 : vector<16x1xf32> to vector<16x32xf32>
      %26 = arith.mulf %16, %25 : vector<16x32xf32>
      %c0_15 = arith.constant 0 : index
      %c0_16 = arith.constant 0 : index
      %27 = vector.load %arg3[%c0_15, %c0_16] : memref<1x32xf32, #tpu.memory_space<vmem>>, vector<1x32xf32>
      %28 = vector.broadcast %27 : vector<1x32xf32> to vector<16x32xf32>
      %29 = arith.mulf %26, %28 : vector<16x32xf32>
      %c0_17 = arith.constant 0 : index
      %c0_18 = arith.constant 0 : index
      %30 = vector.load %arg4[%c0_17, %c0_18] : memref<1x32xf32, #tpu.memory_space<vmem>>, vector<1x32xf32>
      %31 = vector.broadcast %30 : vector<1x32xf32> to vector<16x32xf32>
      %32 = arith.addf %29, %31 : vector<16x32xf32>
      %c0_19 = arith.constant 0 : index
      %c0_20 = arith.constant 0 : index
      %33 = vector.load %arg8[%c0_19, %c0_20] : memref<16x32xf32, #tpu.memory_space<vmem>>, vector<16x32xf32>
      tpu.vector_store %arg8[%c0_19, %c0_20], %32 {strides = array<i32>} : memref<16x32xf32, #tpu.memory_space<vmem>>, vector<16x32xf32>,
    } else {
    }
    %c0 = arith.constant 0 : index
    %c0_1 = arith.constant 0 : index
    %3 = vector.load %arg8[%c0, %c0_1] : memref<16x32xf32, #tpu.memory_space<vmem>>, vector<16x32xf32>
    %c0_2 = arith.constant 0 : index
    %c0_3 = arith.constant 0 : index
    %4 = vector.load %arg5[%c0_2, %c0_3] : memref<32x128xf32, #tpu.memory_space<vmem>>, vector<32x128xf32>
    %cst = arith.constant dense<0.000000e+00> : vector<16x128xf32>
    %5 = tpu.matmul %3, %4, %cst {dimension_numbers = #tpu.dot_dimension_numbers<[1], [0], [0], [1], [0, 0, 1, 1], [], []>} : vector<16x32xf32>, vector<32x128xf32>, vector<16x128xf32> -> vector<16x128xf32>
    %c0_4 = arith.constant 0 : index
    %c0_5 = arith.constant 0 : index
    %6 = vector.load %arg6[%c0_4, %c0_5] : memref<1x128xf32, #tpu.memory_space<vmem>>, vector<1x128xf32>
    %7 = vector.broadcast %6 : vector<1x128xf32> to vector<16x128xf32>
    %8 = arith.addf %5, %7 : vector<16x128xf32>
    %c0_6 = arith.constant 0 : index
    %c0_7 = arith.constant 0 : index
    %9 = vector.load %arg7[%c0_6, %c0_7] : memref<16x128xf32, #tpu.memory_space<vmem>>, vector<16x128xf32>
    tpu.vector_store %arg7[%c0_6, %c0_7], %8 {strides = array<i32>} : memref<16x128xf32, #tpu.memory_space<vmem>>, vector<16x128xf32>,
    return
  }
  func.func @transform_0(%arg0: i32, %arg1: i32) -> (i32, i32) {
    %c0_i32 = arith.constant 0 : i32
    %c0_i32_0 = arith.constant 0 : i32
    return %arg0, %c0_i32 : i32, i32
  }
  func.func @transform_1(%arg0: i32, %arg1: i32) -> (i32, i32) {
    %c0_i32 = arith.constant 0 : i32
    %c0_i32_0 = arith.constant 0 : i32
    %c0_i32_1 = arith.constant 0 : i32
    return %c0_i32, %c0_i32_0 : i32, i32
  }
  func.func @transform_2(%arg0: i32, %arg1: i32) -> (i32, i32) {
    %c0_i32 = arith.constant 0 : i32
    %c0_i32_0 = arith.constant 0 : i32
    %c0_i32_1 = arith.constant 0 : i32
    return %c0_i32, %c0_i32_0 : i32, i32
  }
  func.func @transform_3(%arg0: i32, %arg1: i32) -> (i32, i32) {
    %c0_i32 = arith.constant 0 : i32
    %c0_i32_0 = arith.constant 0 : i32
    return %c0_i32, %arg1 : i32, i32
  }
  func.func @transform_4(%arg0: i32, %arg1: i32) -> (i32, i32) {
    %c0_i32 = arith.constant 0 : i32
    %c0_i32_0 = arith.constant 0 : i32
    return %c0_i32, %arg1 : i32, i32
  }
  func.func @transform_5(%arg0: i32, %arg1: i32) -> (i32, i32) {
    %c0_i32 = arith.constant 0 : i32
    return %arg0, %arg1 : i32, i32
  }
}

</mosaic_0001>

<llo_original>
// kernel: tpu_custom_call.1
$region0: #{tpu_custom_call.1}
  #allocation0 [shape = 'u32[]', space=smem, size = 0x4, offset = 0x4, fixed_abs, tag = 'smem constant byte address 0x4 - core index']
  #allocation1 [shape = 'u32[72,128]{1,0:T(1,128)}', space=vmem, size = 0x9000, scoped, tag = 'internal scratch']
  #allocation2 [shape = 'f32[16,32]{1,0:T(8,128)}', space=vmem, size = 0x2000, scoped, tag = 'scratch operand']
  %s0 = inlined_call_operand.hbm [shape: f32[16,32], index: 0, kind: input, shape index: {}]
  %s1 = inlined_call_operand.hbm [shape: f32[1,32], index: 1, kind: input, shape index: {}]
  %s2 = inlined_call_operand.vmem [shape: f32[1,32], index: 2, kind: input, shape index: {}]
  %s3 = inlined_call_operand.hbm [shape: f32[32,128], index: 3, kind: input, shape index: {}]
  %s4 = inlined_call_operand.vmem [shape: f32[1,128], index: 4, kind: input, shape index: {}]
  %s5 = inlined_call_operand.hbm [shape: f32[16,128], index: 5, kind: output, shape index: {}]
  %s6 = sld [smem:[#allocation0]]
  $region46: #{tpu_custom_call.1} parent=0
    _
  %s8 = ssub.s32 1, %s6
  %s9 = scalar_select 0, %s8, %s6
  $region1: #{tpu_custom_call.1} parent=0
    #allocation3 [shape = 'u8[8192]{0}', space=vmem, size = 0x2000, scoped, tag = 'input window, operand 0, single buffered']
    #allocation4 [shape = 's32[1]{0}', space=sflag, size = 0x4, scoped, tag = 'scoped memory for tpu_custom_call.1']
    #allocation5 [shape = 's32[1]{0}', space=sflag, size = 0x4, scoped, tag = 'scoped memory for tpu_custom_call.1']
    #allocation6 [shape = 'u8[512]{0}', space=vmem, size = 0x400, scoped, tag = 'input window, operand 1, single buffered']
    #allocation7 [shape = 's32[1]{0}', space=sflag, size = 0x4, scoped, tag = 'scoped memory for tpu_custom_call.1']
    #allocation8 [shape = 'u8[16384]{0}', space=vmem, size = 0x4000, scoped, tag = 'input window, operand 3, single buffered']
    #allocation9 [shape = 'u8[8192]{0}', space=vmem, size = 0x2000, scoped, tag = 'output window, operand 0, single buffered']
    %10 = vsyncpa [#allocation4], 0
    %11 = vsyncpa [#allocation7], 0
    %12 = vsyncpa [#allocation5], 0
    // Predicated region
    $region2: #{tpu_custom_call.1} parent=1 // pred_check
      _
    $region3: #{tpu_custom_call.1} parent=1 // pred_check_branch
      %14 = sbr.rel (0) target = $region5
    $region4: #{tpu_custom_call.1} parent=1 // pred_region
      %16 = vsyncadd [#allocation4], 0
      %s17 = sshll.u32 %s0, 4
      %s18 = int_to_ptr.hbm [resolvable:$true] %s17
      %s19 = sshll.u32 [#allocation3], 4
      %s20 = int_to_ptr.vmem [resolvable:$true] %s19
      %25 = dma.hbm_to_vmem [thread:$0]  %s18, 256, %s20, [#allocation4], 128, 128, 8
    $region5: #{tpu_custom_call.1} parent=1 // pred_fallthru
      _
    // Predicated region
    $region6: #{tpu_custom_call.1} parent=1 // pred_check
      _
    $region7: #{tpu_custom_call.1} parent=1 // pred_check_branch
      %27 = sbr.rel (0) target = $region9
    $region8: #{tpu_custom_call.1} parent=1 // pred_region
      %29 = vsyncadd [#allocation7], 0
      %s31 = sshll.u32 %s1, 4
      %s32 = int_to_ptr.hbm [resolvable:$true] %s31
      %s33 = sshll.u32 [#allocation6], 4
      %s34 = int_to_ptr.vmem [resolvable:$true] %s33
      %36 = dma.hbm_to_vmem [thread:$0]  %s32, 16, %s34, [#allocation7]
    $region9: #{tpu_custom_call.1} parent=1 // pred_fallthru
      _
    // Predicated region
    $region10: #{tpu_custom_call.1} parent=1 // pred_check
      _
    $region11: #{tpu_custom_call.1} parent=1 // pred_check_branch
      %38 = sbr.rel (0) target = $region13
    $region12: #{tpu_custom_call.1} parent=1 // pred_region
      _
    $region13: #{tpu_custom_call.1} parent=1 // pred_fallthru
      _
    // Predicated region
    $region14: #{tpu_custom_call.1} parent=1 // pred_check
      _
    $region15: #{tpu_custom_call.1} parent=1 // pred_check_branch
      %40 = sbr.rel (0) target = $region17
    $region16: #{tpu_custom_call.1} parent=1 // pred_region
      %42 = vsyncadd [#allocation7], 0
      %s43 = sshll.u32 %s3, 4
      %s44 = int_to_ptr.hbm [resolvable:$true] %s43
      %s45 = sshll.u32 [#allocation8], 4
      %s46 = int_to_ptr.vmem [resolvable:$true] %s45
      %51 = dma.hbm_to_vmem [thread:$0]  %s44, 512, %s46, [#allocation7], 128, 128, 8
    $region17: #{tpu_custom_call.1} parent=1 // pred_fallthru
      _
    // Predicated region
    $region18: #{tpu_custom_call.1} parent=1 // pred_check
      _
    $region19: #{tpu_custom_call.1} parent=1 // pred_check_branch
      %53 = sbr.rel (0) target = $region21
    $region20: #{tpu_custom_call.1} parent=1 // pred_region
      _
    $region21: #{tpu_custom_call.1} parent=1 // pred_fallthru
      _
    // Predicated region
    $region22: #{tpu_custom_call.1} parent=1 // pred_check
      _
    $region23: #{tpu_custom_call.1} parent=1 // pred_check_branch
      %55 = sbr.rel (0) target = $region25
    $region24: #{tpu_custom_call.1} parent=1 // pred_region
      %57 = dma.done [#allocation4], 256
    $region25: #{tpu_custom_call.1} parent=1 // pred_fallthru
      _
    // Predicated region
    $region26: #{tpu_custom_call.1} parent=1 // pred_check
      _
    $region27: #{tpu_custom_call.1} parent=1 // pred_check_branch
      %59 = sbr.rel (0) target = $region29
    $region28: #{tpu_custom_call.1} parent=1 // pred_region
      %61 = dma.done [#allocation7], 16
    $region29: #{tpu_custom_call.1} parent=1 // pred_fallthru
      _
    // Predicated region
    $region30: #{tpu_custom_call.1} parent=1 // pred_check
      _
    $region31: #{tpu_custom_call.1} parent=1 // pred_check_branch
      %63 = sbr.rel (0) target = $region33
    $region32: #{tpu_custom_call.1} parent=1 // pred_region
      %65 = dma.done [#allocation7], 512
    $region33: #{tpu_custom_call.1} parent=1 // pred_fallthru
      _
    %p66 = scmp.eq.s32.totalorder 0, 0
    // Predicated region
    $region34: #{tpu_custom_call.1} parent=1 // pred_check
      %p67 = pneg %p66
    $region35: #{tpu_custom_call.1} parent=1 // pred_check_branch
      %69 = sbr.rel (%p67) target = $region37
    $region36: #{tpu_custom_call.1} parent=1 // pred_region
      %v70 = vld [vmem:[#allocation3] sm:$0xff]
      %v71 = vld [vmem:[#allocation3 + $0x8] sm:$0xff]
      %vm72 = vcmask 261120
      %v73 = vsel %vm72, %v70, 0.0
      %74 = vadd.xlane.f32.xlu0 %v73
      %v75 = vpop.xlane.xlu0 %74
      %v76 = vsel %vm72, %v71, 0.0
      %77 = vadd.xlane.f32.xlu0 %v76
      %v78 = vpop.xlane.xlu0 %77
      %v79 = vrcp.pop 32.0
      %v80 = vmul.f32 32.0, %v79
      %v81 = vsub.f32 1.0, %v80
      %v82 = vmul.f32 %v79, %v81
      %v83 = vadd.f32 %v79, %v82
      %vm84 = vweird.f32 %v79
      %v85 = vsel %vm84, %v79, %v83
      %v86 = vmul.f32 %v75, %v85
      %v87 = vmul.f32 %v78, %v85
      %v88 = vsub.f32 %v70, %v86
      %v89 = vsub.f32 %v71, %v87
      %v90 = vmul.f32 %v88, %v88
      %v91 = vmul.f32 %v89, %v89
      %v92 = vsel %vm72, %v90, 0.0
      %93 = vadd.xlane.f32.xlu0 %v92
      %v94 = vpop.xlane.xlu0 %93
      %v95 = vsel %vm72, %v91, 0.0
      %96 = vadd.xlane.f32.xlu0 %v95
      %v97 = vpop.xlane.xlu0 %96
      %v98 = vmul.f32 %v94, %v85
      %v99 = vmul.f32 %v97, %v85
      %v100 = vadd.f32 %v98, 1e-05
      %v101 = vadd.f32 %v99, 1e-05
      %v102 = vrsqrt.pop %v100
      %v103 = vmul.f32 %v102, %v100
      %v104 = vmul.f32 %v103, %v102
      %v105 = vmul.f32 0.5, %v104
      %v106 = vsub.f32 1.5, %v105
      %v107 = vmul.f32 %v102, %v106
      %vm108 = vweird.f32 %v100
      %vm109 = vweird.f32 %v102
      %vm110 = vmor %vm108, %vm109
      %v111 = vsel %vm110, %v102, %v107
      %v112 = vrsqrt.pop %v101
      %v113 = vmul.f32 %v112, %v101
      %v114 = vmul.f32 %v113, %v112
      %v115 = vmul.f32 0.5, %v114
      %v116 = vsub.f32 1.5, %v115
      %v117 = vmul.f32 %v112, %v116
      %vm118 = vweird.f32 %v101
      %vm119 = vweird.f32 %v112
      %vm120 = vmor %vm118, %vm119
      %v121 = vsel %vm120, %v112, %v117
      %v122 = vmul.f32 %v88, %v111
      %v123 = vmul.f32 %v89, %v121
      %v124 = vld [vmem:[#allocation6] sm:$0x1]
      %v126 = vperm.slane %v124, 0
      %v128 = vmul.f32 %v122, %v126
      %v129 = vmul.f32 %v123, %v126
      %v130 = vld [vmem:[%s2] sm:$0x1]
      %v132 = vperm.slane %v130, 0
      %v134 = vadd.f32 %v128, %v132
      %v135 = vadd.f32 %v129, %v132
      %136 = vst.msk [vmem:[#allocation2] sm:$0xff] %vm72, %v134
      %137 = vst.msk [vmem:[#allocation2 + $0x8] sm:$0xff] %vm72, %v135
    $region37: #{tpu_custom_call.1} parent=1 // pred_fallthru
      _
    %v138 = vld [vmem:[#allocation2] sm:$0xff]
    %v139 = vld [vmem:[#allocation2 + $0x8] sm:$0xff]
    %v140 = vld [vmem:[#allocation8] sm:$0xff]
    %v141 = vld [vmem:[#allocation8 + $0x8] sm:$0xff]
    %v142 = vld [vmem:[#allocation8 + $0x10] sm:$0xff]
    %v143 = vld [vmem:[#allocation8 + $0x18] sm:$0xff]
    %v144 = vld [vmem:[%s4] sm:$0x1]
    %v146 = vperm.slane %v144, 0
    %vm148 = vcmask 261120
    %v150 = vsel %vm148, %v138, 0
    %v153 = vsel %vm148, %v139, 0
    %155 = vmatpush.msra.mxu0 0.0
    %156 = vmatpush.msra.mxu0 0.0
    %157 = vmatpush.msra.mxu0 0.0
    %158 = vmatpush.msra.mxu0 0.0
    %159 = vmatpush.msra.mxu0 0.0
    %160 = vmatpush.msra.mxu0 0.0
    %161 = vmatpush.msra.mxu0 0.0
    %162 = vmatpush.msra.mxu0 0.0
    %163 = vmatpush.msra.mxu0 0.0
    %164 = vmatpush.msra.mxu0 0.0
    %165 = vmatpush.msra.mxu0 0.0
    %166 = vmatpush.msra.mxu0 0.0
    %167 = vmatpush.msra.mxu0 %v143
    %168 = vmatpush.msra.mxu0 %v142
    %169 = vmatpush.msra.mxu0 %v141
    %170 = vmatpush.msra.mxu0 %v140
    %171 = vmatmul.f32.gmra.mxu0 %v150
    %v172 = vpop.f32.mrf.mxu0
    %v173 = vadd.f32 %v146, %v172
    %174 = vmatmul.f32.gmra.mxu0 %v153
    %v175 = vpop.f32.mrf.mxu0
    %v176 = vadd.f32 %v146, %v175
    %177 = vdwg.mxu0
    %178 = vst [vmem:[#allocation9] sm:$0xff] %v173
    %179 = vst [vmem:[#allocation9 + $0x8] sm:$0xff] %v176
    // Predicated region
    $region38: #{tpu_custom_call.1} parent=1 // pred_check
      _
    $region39: #{tpu_custom_call.1} parent=1 // pred_check_branch
      %181 = sbr.rel (0) target = $region41
    $region40: #{tpu_custom_call.1} parent=1 // pred_region
      %183 = vsyncadd [#allocation5], 0
      %s184 = sshll.u32 [#allocation9], 4
      %s185 = int_to_ptr.vmem [resolvable:$true] %s184
      %s186 = sshll.u32 %s5, 4
      %s187 = int_to_ptr.hbm [resolvable:$true] %s186
      %192 = dma.vmem_to_hbm [thread:$0]  %s185, 256, %s187, [#allocation5], 128, 128, 8
    $region41: #{tpu_custom_call.1} parent=1 // pred_fallthru
      _
    // Predicated region
    $region42: #{tpu_custom_call.1} parent=1 // pred_check
      _
    $region43: #{tpu_custom_call.1} parent=1 // pred_check_branch
      %194 = sbr.rel (0) target = $region45
    $region44: #{tpu_custom_call.1} parent=1 // pred_region
      %196 = dma.done [#allocation5], 256
    $region45: #{tpu_custom_call.1} parent=1 // pred_fallthru
      _
    %197 = vsyncpa [#allocation4], 1
    %198 = vsyncpa [#allocation7], 1
    %199 = vsyncpa [#allocation5], 1

</llo_original>
